<compile_context>
chip_gen: v5e
topology: v5e:2x2
jax: 0.10.0
libtpu: 0.0.40
codegen_flags: <defaults>
</compile_context>

<pallas_src>
import functools

import jax
import jax.numpy as jnp
from jax.experimental import pallas as pl
from jax.experimental.pallas import tpu as pltpu


def _mlp_kernel(p_ref, x_ref, o_ref):
    """p_ref: (9,) f32 SMEM = [w1_00, w1_01, w1_10, w1_11, b1_0, b1_1, w2_0, w2_1, b2]
       x_ref: (2, TR, 128) f32 VMEM  (feature, row-of-128-lanes, lane) -- dense vregs
       o_ref: (TR, 128)    f32 VMEM  (dense, unmasked full-vreg stores)
    """
    x = x_ref[...]
    x0 = x[0]                            # (TR, 128)
    x1 = x[1]                            # (TR, 128)
    # hidden layer: h_j = relu(x0*w1[0,j] + x1*w1[1,j] + b1[j])  -- VPU FMAs
    h0 = jnp.maximum(x0 * p_ref[0] + x1 * p_ref[2] + p_ref[4], 0.0)
    h1 = jnp.maximum(x0 * p_ref[1] + x1 * p_ref[3] + p_ref[5], 0.0)
    # output layer + sigmoid (tanh form -> EUP slot, no full-precision divide)
    z = h0 * p_ref[6] + h1 * p_ref[7] + p_ref[8]
    o_ref[...] = 0.5 * (jnp.tanh(0.5 * z) + 1.0)


def pack_params(w1, b1, w2, b2):
    """Pack the 9 scalar parameters into a flat f32 vector (done once, outside jit).

    w1: (2, 2) stored as (in, out); b1: (2,); w2: (2, 1); b2: (1,).
    """
    return jnp.concatenate([
        w1.astype(jnp.float32).reshape(-1),   # w1_00, w1_01, w1_10, w1_11
        b1.astype(jnp.float32).reshape(-1),   # b1_0, b1_1
        w2.astype(jnp.float32).reshape(-1),   # w2_0, w2_1
        b2.astype(jnp.float32).reshape(-1),   # b2
    ])


def _round_up(x, m):
    return -(-x // m) * m


# Max rows of 128 lanes per tile: 4096 rows = 512K samples/tile.
# Per-step blocks: in 2*TR*128*4 B + out TR*128*4 B = 6 MiB at TR=4096;
# double-buffered ~12 MiB -> under v5e's 16 MiB scoped-VMEM default and well
# under v6e/v7x's 32 MiB default (v7x physical VMEM is 64 MiB).
_TR_MAX = 4096


def _select_tile_rows(rows):
    """Choose rows-of-128-lanes per grid step (multiple of 8 for sublane tiling)."""
    if rows <= 32:                       # <= 4096 samples: one small tile is fine
        return _round_up(rows, 8)
    # aim for >= 4 grid steps so v7x's 2 TensorCores both get work,
    # but cap the tile so the double-buffered working set stays ~12 MiB
    return min(_TR_MAX, _round_up(-(-rows // 4), 8))


@functools.partial(jax.jit, static_argnames=("tile_rows",))
def neural_network_forward(x, params, tile_rows=None):
    """x: (B, 2) float; params: (9,) f32 from pack_params -> (B, 1) f32."""
    B, D = x.shape
    assert D == 2, "kernel is specialized for number_of_dim=2"

    rows = pl.cdiv(B, 128)               # batch rows of 128 lanes
    if tile_rows is None:
        TR = _select_tile_rows(rows)
    else:
        assert tile_rows >= 8 and tile_rows % 8 == 0, "tile_rows must be a multiple of 8"
        TR = tile_rows
    grid = pl.cdiv(rows, TR)
    Rp = grid * TR                       # padded row count
    BP = Rp * 128                        # padded batch (lanes)

    # batch -> lanes, padded, repacked into dense (2, Rp, 128) vreg tiles.
    # All three ops are inside this jit, so XLA fuses them into one copy.
    xT = jnp.transpose(x.astype(jnp.float32))        # (2, B)
    xT = jnp.pad(xT, ((0, 0), (0, BP - B)))          # (2, BP)
    x3 = xT.reshape(2, Rp, 128)                      # (2, Rp, 128)

    out = pl.pallas_call(
        _mlp_kernel,
        out_shape=jax.ShapeDtypeStruct((Rp, 128), jnp.float32),
        grid=(grid,),
        in_specs=[
            pl.BlockSpec(memory_space=pltpu.MemorySpace.SMEM),     # 9 params, SMEM
            pl.BlockSpec((2, TR, 128), lambda i: (0, i, 0)),       # dense x tile
        ],
        out_specs=pl.BlockSpec((TR, 128), lambda i: (i, 0)),       # dense output tile
        compiler_params=pltpu.CompilerParams(
            dimension_semantics=("parallel",),
        ),
    )(params, x3)

    return out.reshape(BP)[:B].reshape(B, 1)


def init_params(key, number_of_dim=2):
    """Deterministic init mimicking nn.Linear's U(-1/sqrt(fan_in), 1/sqrt(fan_in))."""
    k1, k2, k3, k4 = jax.random.split(key, 4)
    bound1 = 1.0 / jnp.sqrt(number_of_dim)
    # fully_connected_1: Linear(number_of_dim, 2) -> stored as (in, out)
    w1 = jax.random.uniform(k1, (number_of_dim, 2), jnp.float32, -bound1, bound1)
    b1 = jax.random.uniform(k2, (2,), jnp.float32, -bound1, bound1)
    # output_layer: Linear(number_of_dim, 1) -> stored as (in, out)
    w2 = jax.random.uniform(k3, (number_of_dim, 1), jnp.float32, -bound1, bound1)
    b2 = jax.random.uniform(k4, (1,), jnp.float32, -bound1, bound1)
    return w1, b1, w2, b2


# TODO(synk): hidden_layer=False (pure perceptron) path of the PyTorch module is
# not wired up; only the default hidden_layer=True forward is implemented.


if __name__ == "__main__":
    key = jax.random.PRNGKey(0)
    kx, kp, kx2 = jax.random.split(key, 3)

    number_of_dim = 2
    w1, b1, w2, b2 = init_params(kp, number_of_dim)
    params = pack_params(w1, b1, w2, b2)   # packed once, outside the jitted forward

    # small-batch correctness check (single tile)
    batch = 8
    x = jax.random.normal(kx, (batch, number_of_dim), jnp.float32)
    out = jax.block_until_ready(neural_network_forward(x, params))
    ref = jax.nn.sigmoid(jnp.maximum(x @ w1 + b1, 0.0) @ w2 + b2)
    assert out.shape == (batch, 1)
    assert jnp.allclose(out, ref, atol=1e-5), "mismatch vs reference (small batch)"

    # exercise the multi-tile "parallel" grid path (grid = 3 with tile_rows=8)
    batch2 = 3000
    x2 = jax.random.normal(kx2, (batch2, number_of_dim), jnp.float32)
    out2 = jax.block_until_ready(neural_network_forward(x2, params, tile_rows=8))
    ref2 = jax.nn.sigmoid(jnp.maximum(x2 @ w1 + b1, 0.0) @ w2 + b2)
    assert out2.shape == (batch2, 1)
    assert jnp.allclose(out2, ref2, atol=1e-5), "mismatch vs reference (tiled batch)"

    print("KERNEL_OK")
</pallas_src>

<mosaic_0001>
module attributes {stable_mosaic.version = 11 : i64} {
  func.func @_mlp_kernel(%arg0: i32, %arg1: memref<9xf32, #tpu.memory_space<smem>>, %arg2: memref<2x8x128xf32, #tpu.memory_space<vmem>>, %arg3: memref<8x128xf32, #tpu.memory_space<vmem>>) attributes {dimension_semantics = [#tpu.dimension_semantics<parallel>], iteration_bounds = array<i64: 1>, scalar_prefetch = 0 : i64, scratch_operands = 0 : i64, tpu.core_type = #tpu.core_type<tc>, window_params = [{transform_indices = @transform_0, window_bounds = array<i64: 9>}, {transform_indices = @transform_1, window_bounds = array<i64: 2, 8, 128>}, {transform_indices = @transform_2, window_bounds = array<i64: 8, 128>}]} {
    %c0 = arith.constant 0 : index
    %c0_0 = arith.constant 0 : index
    %c0_1 = arith.constant 0 : index
    %0 = vector.load %arg2[%c0, %c0_0, %c0_1] : memref<2x8x128xf32, #tpu.memory_space<vmem>>, vector<2x8x128xf32>
    %1 = vector.extract_strided_slice %0 {offsets = [0, 0, 0], sizes = [1, 8, 128], strides = [1, 1, 1]} : vector<2x8x128xf32> to vector<1x8x128xf32>
    %2 = vector.shape_cast %1 : vector<1x8x128xf32> to vector<8x128xf32>
    %3 = vector.extract_strided_slice %0 {offsets = [1, 0, 0], sizes = [1, 8, 128], strides = [1, 1, 1]} : vector<2x8x128xf32> to vector<1x8x128xf32>
    %4 = vector.shape_cast %3 : vector<1x8x128xf32> to vector<8x128xf32>
    %c0_2 = arith.constant 0 : index
    %5 = memref.load %arg1[%c0_2] : memref<9xf32, #tpu.memory_space<smem>>
    %6 = vector.broadcast %5 : f32 to vector<8x128xf32>
    %7 = arith.mulf %2, %6 : vector<8x128xf32>
    %c2 = arith.constant 2 : index
    %8 = memref.load %arg1[%c2] : memref<9xf32, #tpu.memory_space<smem>>
    %9 = vector.broadcast %8 : f32 to vector<8x128xf32>
    %10 = arith.mulf %4, %9 : vector<8x128xf32>
    %11 = arith.addf %7, %10 : vector<8x128xf32>
    %c4 = arith.constant 4 : index
    %12 = memref.load %arg1[%c4] : memref<9xf32, #tpu.memory_space<smem>>
    %13 = vector.broadcast %12 : f32 to vector<8x128xf32>
    %14 = arith.addf %11, %13 : vector<8x128xf32>
    %cst = arith.constant 0.000000e+00 : f32
    %15 = vector.broadcast %cst : f32 to vector<8x128xf32>
    %16 = arith.maximumf %14, %15 : vector<8x128xf32>
    %c1 = arith.constant 1 : index
    %17 = memref.load %arg1[%c1] : memref<9xf32, #tpu.memory_space<smem>>
    %18 = vector.broadcast %17 : f32 to vector<8x128xf32>
    %19 = arith.mulf %2, %18 : vector<8x128xf32>
    %c3 = arith.constant 3 : index
    %20 = memref.load %arg1[%c3] : memref<9xf32, #tpu.memory_space<smem>>
    %21 = vector.broadcast %20 : f32 to vector<8x128xf32>
    %22 = arith.mulf %4, %21 : vector<8x128xf32>
    %23 = arith.addf %19, %22 : vector<8x128xf32>
    %c5 = arith.constant 5 : index
    %24 = memref.load %arg1[%c5] : memref<9xf32, #tpu.memory_space<smem>>
    %25 = vector.broadcast %24 : f32 to vector<8x128xf32>
    %26 = arith.addf %23, %25 : vector<8x128xf32>
    %cst_3 = arith.constant 0.000000e+00 : f32
    %27 = vector.broadcast %cst_3 : f32 to vector<8x128xf32>
    %28 = arith.maximumf %26, %27 : vector<8x128xf32>
    %c6 = arith.constant 6 : index
    %29 = memref.load %arg1[%c6] : memref<9xf32, #tpu.memory_space<smem>>
    %30 = vector.broadcast %29 : f32 to vector<8x128xf32>
    %31 = arith.mulf %16, %30 : vector<8x128xf32>
    %c7 = arith.constant 7 : index
    %32 = memref.load %arg1[%c7] : memref<9xf32, #tpu.memory_space<smem>>
    %33 = vector.broadcast %32 : f32 to vector<8x128xf32>
    %34 = arith.mulf %28, %33 : vector<8x128xf32>
    %35 = arith.addf %31, %34 : vector<8x128xf32>
    %c8 = arith.constant 8 : index
    %36 = memref.load %arg1[%c8] : memref<9xf32, #tpu.memory_space<smem>>
    %37 = vector.broadcast %36 : f32 to vector<8x128xf32>
    %38 = arith.addf %35, %37 : vector<8x128xf32>
    %cst_4 = arith.constant 5.000000e-01 : f32
    %39 = vector.broadcast %cst_4 : f32 to vector<8x128xf32>
    %40 = arith.mulf %39, %38 : vector<8x128xf32>
    %41 = math.tanh %40 : vector<8x128xf32>
    %cst_5 = arith.constant 1.000000e+00 : f32
    %42 = vector.broadcast %cst_5 : f32 to vector<8x128xf32>
    %43 = arith.addf %41, %42 : vector<8x128xf32>
    %cst_6 = arith.constant 5.000000e-01 : f32
    %44 = vector.broadcast %cst_6 : f32 to vector<8x128xf32>
    %45 = arith.mulf %44, %43 : vector<8x128xf32>
    %c0_7 = arith.constant 0 : index
    %c0_8 = arith.constant 0 : index
    %46 = vector.load %arg3[%c0_7, %c0_8] : memref<8x128xf32, #tpu.memory_space<vmem>>, vector<8x128xf32>
    tpu.vector_store %arg3[%c0_7, %c0_8], %45 {strides = array<i32>} : memref<8x128xf32, #tpu.memory_space<vmem>>, vector<8x128xf32>,
    return
  }
  func.func @transform_0(%arg0: i32) -> i32 {
    %c0_i32 = arith.constant 0 : i32
    %c0_i32_0 = arith.constant 0 : i32
    return %c0_i32 : i32
  }
  func.func @transform_1(%arg0: i32) -> (i32, i32, i32) {
    %c0_i32 = arith.constant 0 : i32
    %c0_i32_0 = arith.constant 0 : i32
    %c0_i32_1 = arith.constant 0 : i32
    return %c0_i32, %arg0, %c0_i32_0 : i32, i32, i32
  }
  func.func @transform_2(%arg0: i32) -> (i32, i32) {
    %c0_i32 = arith.constant 0 : i32
    %c0_i32_0 = arith.constant 0 : i32
    return %arg0, %c0_i32 : i32, i32
  }
}

</mosaic_0001>

<llo_original>
// kernel: neural_network_forward.1
$region0: #{neural_network_forward.1}
  #allocation0 [shape = 'u32[]', space=smem, size = 0x4, offset = 0x4, fixed_abs, tag = 'smem constant byte address 0x4 - core index']
  #allocation1 [shape = 'u32[72,128]{1,0:T(1,128)}', space=vmem, size = 0x9000, scoped, tag = 'internal scratch']
  %s0 = inlined_call_operand.vmem [shape: f32[9], index: 0, kind: input, shape index: {}]
  %s1 = inlined_call_operand.vmem [shape: f32[2,8,128], index: 1, kind: input, shape index: {}]
  %s2 = inlined_call_operand.vmem [shape: f32[8,128], index: 2, kind: output, shape index: {}]
  %s3 = sld [smem:[#allocation0]]
  $region22: #{neural_network_forward.1} parent=0
    _
  %s5 = ssub.s32 1, %s3
  %s6 = scalar_select 0, %s5, %s3
  $region1: #{neural_network_forward.1} parent=0
    #allocation2 [shape = 'u8[512]{0}', space=smem, size = 0x200, scoped, tag = 'input window, operand 0, single buffered']
    #allocation3 [shape = 's32[1]{0}', space=sflag, size = 0x4, scoped, tag = 'scoped memory for neural_network_forward.1']
    %7 = vsyncpa [#allocation3], 0
    // Predicated region
    $region2: #{neural_network_forward.1} parent=1 // pred_check
      _
    $region3: #{neural_network_forward.1} parent=1 // pred_check_branch
      %9 = sbr.rel (0) target = $region5
    $region4: #{neural_network_forward.1} parent=1 // pred_region
      %11 = vsyncadd [#allocation3], 0
      %s13 = sshll.u32 %s0, 4
      %s14 = int_to_ptr.vmem [resolvable:$true] %s13
      %16 = dma.vmem_to_smem %s14, 16, [#allocation2], [#allocation3]
    $region5: #{neural_network_forward.1} parent=1 // pred_fallthru
      _
    // Predicated region
    $region6: #{neural_network_forward.1} parent=1 // pred_check
      _
    $region7: #{neural_network_forward.1} parent=1 // pred_check_branch
      %18 = sbr.rel (0) target = $region9
    $region8: #{neural_network_forward.1} parent=1 // pred_region
      _
    $region9: #{neural_network_forward.1} parent=1 // pred_fallthru
      _
    // Predicated region
    $region10: #{neural_network_forward.1} parent=1 // pred_check
      _
    $region11: #{neural_network_forward.1} parent=1 // pred_check_branch
      %20 = sbr.rel (0) target = $region13
    $region12: #{neural_network_forward.1} parent=1 // pred_region
      %22 = dma.done [#allocation3], 16
    $region13: #{neural_network_forward.1} parent=1 // pred_fallthru
      _
    %23 = sfence
    %v24 = vld [vmem:[%s1] sm:$0xff]
    %v25 = vld [vmem:[%s1 + $0x8] sm:$0xff]
    %s26 = sld [smem:[#allocation2]]
    %v27 = vstv %s26
    %v28 = vmul.f32 %v24, %v27
    %s29 = sld [smem:[#allocation2 + $0x2]]
    %v30 = vstv %s29
    %v31 = vmul.f32 %v25, %v30
    %v32 = vadd.f32 %v28, %v31
    %s33 = sld [smem:[#allocation2 + $0x4]]
    %v34 = vstv %s33
    %v35 = vadd.f32 %v32, %v34
    %v36 = vmax.f32 %v35, 0.0
    %s37 = sld [smem:[#allocation2 + $0x1]]
    %v38 = vstv %s37
    %v39 = vmul.f32 %v24, %v38
    %s40 = sld [smem:[#allocation2 + $0x3]]
    %v41 = vstv %s40
    %v42 = vmul.f32 %v25, %v41
    %v43 = vadd.f32 %v39, %v42
    %s44 = sld [smem:[#allocation2 + $0x5]]
    %v45 = vstv %s44
    %v46 = vadd.f32 %v43, %v45
    %v47 = vmax.f32 %v46, 0.0
    %s48 = sld [smem:[#allocation2 + $0x6]]
    %v49 = vstv %s48
    %v50 = vmul.f32 %v36, %v49
    %s51 = sld [smem:[#allocation2 + $0x7]]
    %v52 = vstv %s51
    %v53 = vmul.f32 %v47, %v52
    %v54 = vadd.f32 %v50, %v53
    %s55 = sld [smem:[#allocation2 + $0x8]]
    %v56 = vstv %s55
    %v57 = vadd.f32 %v54, %v56
    %v58 = vmul.f32 %v57, 0.5
    %v59 = vtanh.pop %v58
    %v60 = vadd.f32 %v59, 1.0
    %v61 = vmul.f32 %v60, 0.5
    %62 = vst [vmem:[%s2] sm:$0xff] %v61
    // Predicated region
    $region14: #{neural_network_forward.1} parent=1 // pred_check
      _
    $region15: #{neural_network_forward.1} parent=1 // pred_check_branch
      %64 = sbr.rel (0) target = $region17
    $region16: #{neural_network_forward.1} parent=1 // pred_region
      _
    $region17: #{neural_network_forward.1} parent=1 // pred_fallthru
      _
    // Predicated region
    $region18: #{neural_network_forward.1} parent=1 // pred_check
      _
    $region19: #{neural_network_forward.1} parent=1 // pred_check_branch
      %66 = sbr.rel (0) target = $region21
    $region20: #{neural_network_forward.1} parent=1 // pred_region
      _
    $region21: #{neural_network_forward.1} parent=1 // pred_fallthru
      _
    %67 = vsyncpa [#allocation3], 1

</llo_original>
